<compile_context>
chip_gen: v5e
topology: v5e:2x2
jax: 0.10.0
libtpu: 0.0.40
codegen_flags: <defaults>
</compile_context>

<pallas_src>
import jax
import jax.numpy as jnp
from jax.experimental import pallas as pl
from jax.experimental.pallas import tpu as pltpu


# ----------------------------- Pallas kernel --------------------------------

def _critic_fused_kernel(x_ref, act_ref,
                         enc_w_ref, enc_b_ref,
                         w1f_ref, w1a_ref, b1_ref,
                         w2_ref, b2_ref,
                         w3_ref, b3_ref,
                         o_ref):
    # --- encoder: feat = relu(x @ W_enc + b_enc)   (bf16 MXU, f32 accumulate)
    feat = jnp.dot(x_ref[...], enc_w_ref[...], preferred_element_type=jnp.float32)
    feat = jnp.maximum(feat + enc_b_ref[...], 0.0)

    # --- twin-Q layer 1 (both heads merged along the lane axis)
    # concat(feat, act) @ W1 + b1  ==  feat @ W1_feat + act @ W1_act + b1 (exact)
    h1 = (jnp.dot(feat, w1f_ref[...], preferred_element_type=jnp.float32)
          + jnp.dot(act_ref[...], w1a_ref[...], preferred_element_type=jnp.float32)
          + b1_ref[...])
    h1 = jnp.maximum(h1, 0.0)

    # --- twin-Q layer 2 (block-diagonal (2H, 2H), cross blocks are zero)
    h2 = jnp.dot(h1, w2_ref[...], preferred_element_type=jnp.float32) + b2_ref[...]
    h2 = jnp.maximum(h2, 0.0)

    # --- twin-Q layer 3, lane-padded to 128 output columns -> unmasked store
    o_ref[...] = jnp.dot(h2, w3_ref[...], preferred_element_type=jnp.float32) + b3_ref[...]


def _vmem_spec():
    return pl.BlockSpec(memory_space=pltpu.MemorySpace.VMEM)


# ------------------------------ JAX wrapper ----------------------------------

_OUT_LANES = 128  # lane-dense output width (q1 in column 0, q2 in column 1)


def critic_forward(x, action, packed):
    """x: (B, C, H, W) NCHW, action: (B, A). Returns (q1, q2), each (B, 1)."""
    B = x.shape[0]
    x_flat = x.reshape(B, -1).astype(jnp.bfloat16)      # glue: flatten + bf16 cast
    action = action.astype(jnp.float32)

    chw = x_flat.shape[1]
    enc_out = packed["enc_w"].shape[1]
    a_dim = packed["w1_act"].shape[0]
    h2x = packed["b1"].shape[1]                          # 2 * hidden

    flops = 2 * B * (chw * enc_out + enc_out * h2x + a_dim * h2x
                     + h2x * h2x + h2x * _OUT_LANES)
    bytes_accessed = (x_flat.size * 2 + action.size * 4
                      + sum(int(v.size) * v.dtype.itemsize for v in packed.values())
                      + B * _OUT_LANES * 4)

    out = pl.pallas_call(
        _critic_fused_kernel,
        out_shape=jax.ShapeDtypeStruct((B, _OUT_LANES), jnp.float32),
        in_specs=[_vmem_spec()] * 11,
        out_specs=_vmem_spec(),
        cost_estimate=pl.CostEstimate(flops=int(flops), transcendentals=0,
                                      bytes_accessed=int(bytes_accessed)),
        compiler_params=pltpu.CompilerParams(vmem_limit_bytes=32 * 1024 * 1024),
    )(x_flat, action,
      packed["enc_w"], packed["enc_b"],
      packed["w1_feat"], packed["w1_act"], packed["b1"],
      packed["w2"], packed["b2"],
      packed["w3"], packed["b3"])

    # TODO(synk): `detach=False` in the torch module is a grad-stop flag; it is
    # irrelevant for a pure forward pass and not modeled here.
    return out[:, 0:1], out[:, 1:2]


# ----------------------------- param construction ----------------------------

def make_linear_params(key, fan_in, fan_out):
    kw, kb = jax.random.split(key)
    scale = 1.0 / jnp.sqrt(jnp.float32(fan_in))
    w = jax.random.uniform(kw, (fan_in, fan_out), jnp.float32, -scale, scale)
    b = jax.random.uniform(kb, (1, fan_out), jnp.float32, -scale, scale)
    return w, b


def make_qfunc_params(key, obs_dim, action_dim, hidden_dim):
    k1, k2, k3 = jax.random.split(key, 3)
    w1, b1 = make_linear_params(k1, obs_dim + action_dim, hidden_dim)
    w2, b2 = make_linear_params(k2, hidden_dim, hidden_dim)
    w3, b3 = make_linear_params(k3, hidden_dim, 1)
    return {"w1": w1, "b1": b1, "w2": w2, "b2": b2, "w3": w3, "b3": b3}


def pack_critic_params(enc_params, q1p, q2p, obs_dim):
    """Merge twin-Q heads along the lane axis (exact) and lane-pad layer 3."""
    w1 = jnp.concatenate([q1p["w1"], q2p["w1"]], axis=1)          # (obs+act, 2H)
    b1 = jnp.concatenate([q1p["b1"], q2p["b1"]], axis=1)          # (1, 2H)
    w2 = jax.scipy.linalg.block_diag(q1p["w2"], q2p["w2"])        # (2H, 2H)
    b2 = jnp.concatenate([q1p["b2"], q2p["b2"]], axis=1)          # (1, 2H)
    w3 = jax.scipy.linalg.block_diag(q1p["w3"], q2p["w3"])        # (2H, 2)
    b3 = jnp.concatenate([q1p["b3"], q2p["b3"]], axis=1)          # (1, 2)
    # Pad the final layer to 128 lanes so the kernel output store is unmasked.
    w3 = jnp.pad(w3, ((0, 0), (0, _OUT_LANES - w3.shape[1])))
    b3 = jnp.pad(b3, ((0, 0), (0, _OUT_LANES - b3.shape[1])))
    return {
        "enc_w": enc_params["w"].astype(jnp.bfloat16),            # dominant DMA -> bf16
        "enc_b": enc_params["b"].astype(jnp.float32),
        "w1_feat": w1[:obs_dim], "w1_act": w1[obs_dim:], "b1": b1,
        "w2": w2, "b2": b2, "w3": w3, "b3": b3,
    }


# ------------------------------ reference (JAX) -------------------------------

def critic_reference(x, action, enc_params, q1_params, q2_params,
                     encoder_dtype=jnp.float32):
    B = x.shape[0]
    xf = x.reshape(B, -1)
    feat = jnp.dot(xf.astype(encoder_dtype), enc_params["w"].astype(encoder_dtype),
                   preferred_element_type=jnp.float32)
    feat = jnp.maximum(feat + enc_params["b"], 0.0)

    def q(p):
        oa = jnp.concatenate([feat, action.astype(jnp.float32)], axis=1)
        h1 = jnp.maximum(oa @ p["w1"] + p["b1"], 0.0)
        h2 = jnp.maximum(h1 @ p["w2"] + p["b2"], 0.0)
        return h2 @ p["w3"] + p["b3"]

    return q(q1_params), q(q2_params)


# ----------------------------------- main -------------------------------------

if __name__ == "__main__":
    B, C, H, W = 2, 4, 16, 16          # NCHW image input
    action_dim = 4
    hidden_dim = 32
    out_dim = 32                        # encoder.out_dim

    key = jax.random.PRNGKey(0)
    kx, ka, kenc, kq1, kq2 = jax.random.split(key, 5)

    x = jax.random.normal(kx, (B, C, H, W), jnp.float32)
    action = jax.random.normal(ka, (B, action_dim), jnp.float32)

    enc_w, enc_b = make_linear_params(kenc, C * H * W, out_dim)
    enc_params = {"w": enc_w, "b": enc_b}
    q1_params = make_qfunc_params(kq1, out_dim, action_dim, hidden_dim)
    q2_params = make_qfunc_params(kq2, out_dim, action_dim, hidden_dim)

    packed = pack_critic_params(enc_params, q1_params, q2_params, out_dim)

    q1, q2 = critic_forward(x, action, packed)
    q1 = jax.block_until_ready(q1)
    q2 = jax.block_until_ready(q2)
    assert q1.shape == (B, 1) and q2.shape == (B, 1)

    # Exact-parity check: reference using the same bf16 encoder matmul.
    r1, r2 = critic_reference(x, action, enc_params, q1_params, q2_params,
                              encoder_dtype=jnp.bfloat16)
    assert jnp.allclose(q1, r1, atol=1e-3, rtol=1e-3)
    assert jnp.allclose(q2, r2, atol=1e-3, rtol=1e-3)

    # Loose check against the pure-f32 torch-equivalent math (bf16 encoder
    # weights introduce only a small quantization difference).
    f1, f2 = critic_reference(x, action, enc_params, q1_params, q2_params,
                              encoder_dtype=jnp.float32)
    assert jnp.allclose(q1, f1, atol=5e-2, rtol=5e-2)
    assert jnp.allclose(q2, f2, atol=5e-2, rtol=5e-2)

    print("KERNEL_OK")
</pallas_src>

<mosaic_0001>
module attributes {stable_mosaic.version = 11 : i64} {
  func.func @_critic_fused_kernel(%arg0: memref<2x1024xbf16, #tpu.memory_space<vmem>>, %arg1: memref<2x4xf32, #tpu.memory_space<vmem>>, %arg2: memref<1024x32xbf16, #tpu.memory_space<vmem>>, %arg3: memref<1x32xf32, #tpu.memory_space<vmem>>, %arg4: memref<32x64xf32, #tpu.memory_space<vmem>>, %arg5: memref<4x64xf32, #tpu.memory_space<vmem>>, %arg6: memref<1x64xf32, #tpu.memory_space<vmem>>, %arg7: memref<64x64xf32, #tpu.memory_space<vmem>>, %arg8: memref<1x64xf32, #tpu.memory_space<vmem>>, %arg9: memref<64x128xf32, #tpu.memory_space<vmem>>, %arg10: memref<1x128xf32, #tpu.memory_space<vmem>>, %arg11: memref<2x128xf32, #tpu.memory_space<vmem>>) attributes {dimension_semantics = [], scalar_prefetch = 0 : i64, scratch_operands = 0 : i64, tpu.core_type = #tpu.core_type<tc>} {
    %c0 = arith.constant 0 : index
    %c0_0 = arith.constant 0 : index
    %0 = vector.load %arg0[%c0, %c0_0] : memref<2x1024xbf16, #tpu.memory_space<vmem>>, vector<2x1024xbf16>
    %c0_1 = arith.constant 0 : index
    %c0_2 = arith.constant 0 : index
    %1 = vector.load %arg2[%c0_1, %c0_2] : memref<1024x32xbf16, #tpu.memory_space<vmem>>, vector<1024x32xbf16>
    %cst = arith.constant dense<0.000000e+00> : vector<2x32xf32>
    %2 = tpu.matmul %0, %1, %cst {dimension_numbers = #tpu.dot_dimension_numbers<[1], [0], [0], [1], [0, 0, 1, 1], [], []>} : vector<2x1024xbf16>, vector<1024x32xbf16>, vector<2x32xf32> -> vector<2x32xf32>
    %c0_3 = arith.constant 0 : index
    %c0_4 = arith.constant 0 : index
    %3 = vector.load %arg3[%c0_3, %c0_4] : memref<1x32xf32, #tpu.memory_space<vmem>>, vector<1x32xf32>
    %4 = vector.broadcast %3 : vector<1x32xf32> to vector<2x32xf32>
    %5 = arith.addf %2, %4 : vector<2x32xf32>
    %cst_5 = arith.constant 0.000000e+00 : f32
    %6 = vector.broadcast %cst_5 : f32 to vector<2x32xf32>
    %7 = arith.maximumf %5, %6 : vector<2x32xf32>
    %c0_6 = arith.constant 0 : index
    %c0_7 = arith.constant 0 : index
    %8 = vector.load %arg4[%c0_6, %c0_7] : memref<32x64xf32, #tpu.memory_space<vmem>>, vector<32x64xf32>
    %cst_8 = arith.constant dense<0.000000e+00> : vector<2x64xf32>
    %9 = tpu.matmul %7, %8, %cst_8 {dimension_numbers = #tpu.dot_dimension_numbers<[1], [0], [0], [1], [0, 0, 1, 1], [], []>} : vector<2x32xf32>, vector<32x64xf32>, vector<2x64xf32> -> vector<2x64xf32>
    %c0_9 = arith.constant 0 : index
    %c0_10 = arith.constant 0 : index
    %10 = vector.load %arg1[%c0_9, %c0_10] : memref<2x4xf32, #tpu.memory_space<vmem>>, vector<2x4xf32>
    %c0_11 = arith.constant 0 : index
    %c0_12 = arith.constant 0 : index
    %11 = vector.load %arg5[%c0_11, %c0_12] : memref<4x64xf32, #tpu.memory_space<vmem>>, vector<4x64xf32>
    %cst_13 = arith.constant dense<0.000000e+00> : vector<2x64xf32>
    %12 = tpu.matmul %10, %11, %cst_13 {dimension_numbers = #tpu.dot_dimension_numbers<[1], [0], [0], [1], [0, 0, 1, 1], [], []>} : vector<2x4xf32>, vector<4x64xf32>, vector<2x64xf32> -> vector<2x64xf32>
    %13 = arith.addf %9, %12 : vector<2x64xf32>
    %c0_14 = arith.constant 0 : index
    %c0_15 = arith.constant 0 : index
    %14 = vector.load %arg6[%c0_14, %c0_15] : memref<1x64xf32, #tpu.memory_space<vmem>>, vector<1x64xf32>
    %15 = vector.broadcast %14 : vector<1x64xf32> to vector<2x64xf32>
    %16 = arith.addf %13, %15 : vector<2x64xf32>
    %cst_16 = arith.constant 0.000000e+00 : f32
    %17 = vector.broadcast %cst_16 : f32 to vector<2x64xf32>
    %18 = arith.maximumf %16, %17 : vector<2x64xf32>
    %c0_17 = arith.constant 0 : index
    %c0_18 = arith.constant 0 : index
    %19 = vector.load %arg7[%c0_17, %c0_18] : memref<64x64xf32, #tpu.memory_space<vmem>>, vector<64x64xf32>
    %cst_19 = arith.constant dense<0.000000e+00> : vector<2x64xf32>
    %20 = tpu.matmul %18, %19, %cst_19 {dimension_numbers = #tpu.dot_dimension_numbers<[1], [0], [0], [1], [0, 0, 1, 1], [], []>} : vector<2x64xf32>, vector<64x64xf32>, vector<2x64xf32> -> vector<2x64xf32>
    %c0_20 = arith.constant 0 : index
    %c0_21 = arith.constant 0 : index
    %21 = vector.load %arg8[%c0_20, %c0_21] : memref<1x64xf32, #tpu.memory_space<vmem>>, vector<1x64xf32>
    %22 = vector.broadcast %21 : vector<1x64xf32> to vector<2x64xf32>
    %23 = arith.addf %20, %22 : vector<2x64xf32>
    %cst_22 = arith.constant 0.000000e+00 : f32
    %24 = vector.broadcast %cst_22 : f32 to vector<2x64xf32>
    %25 = arith.maximumf %23, %24 : vector<2x64xf32>
    %c0_23 = arith.constant 0 : index
    %c0_24 = arith.constant 0 : index
    %26 = vector.load %arg9[%c0_23, %c0_24] : memref<64x128xf32, #tpu.memory_space<vmem>>, vector<64x128xf32>
    %cst_25 = arith.constant dense<0.000000e+00> : vector<2x128xf32>
    %27 = tpu.matmul %25, %26, %cst_25 {dimension_numbers = #tpu.dot_dimension_numbers<[1], [0], [0], [1], [0, 0, 1, 1], [], []>} : vector<2x64xf32>, vector<64x128xf32>, vector<2x128xf32> -> vector<2x128xf32>
    %c0_26 = arith.constant 0 : index
    %c0_27 = arith.constant 0 : index
    %28 = vector.load %arg10[%c0_26, %c0_27] : memref<1x128xf32, #tpu.memory_space<vmem>>, vector<1x128xf32>
    %29 = vector.broadcast %28 : vector<1x128xf32> to vector<2x128xf32>
    %30 = arith.addf %27, %29 : vector<2x128xf32>
    %c0_28 = arith.constant 0 : index
    %c0_29 = arith.constant 0 : index
    %31 = vector.load %arg11[%c0_28, %c0_29] : memref<2x128xf32, #tpu.memory_space<vmem>>, vector<2x128xf32>
    tpu.vector_store %arg11[%c0_28, %c0_29], %30 {strides = array<i32>} : memref<2x128xf32, #tpu.memory_space<vmem>>, vector<2x128xf32>,
    return
  }
}

</mosaic_0001>

<llo_original>
// kernel: tpu_custom_call.1
$region0: #{tpu_custom_call.1}
  #allocation0 [shape = 'u32[]', space=smem, size = 0x4, offset = 0x4, fixed_abs, tag = 'smem constant byte address 0x4 - core index']
  #allocation1 [shape = 'u32[72,128]{1,0:T(1,128)}', space=vmem, size = 0x9000, scoped, tag = 'internal scratch']
  %s0 = inlined_call_operand.vmem [shape: bf16[2,1024], index: 0, kind: input, shape index: {}]
  %s1 = inlined_call_operand.vmem [shape: f32[2,4], index: 1, kind: input, shape index: {}]
  %s2 = inlined_call_operand.vmem [shape: bf16[1024,32], index: 2, kind: input, shape index: {}]
  %s3 = inlined_call_operand.vmem [shape: f32[1,32], index: 3, kind: input, shape index: {}]
  %s4 = inlined_call_operand.vmem [shape: f32[32,64], index: 4, kind: input, shape index: {}]
  %s5 = inlined_call_operand.vmem [shape: f32[4,64], index: 5, kind: input, shape index: {}]
  %s6 = inlined_call_operand.vmem [shape: f32[1,64], index: 6, kind: input, shape index: {}]
  %s7 = inlined_call_operand.vmem [shape: f32[64,64], index: 7, kind: input, shape index: {}]
  %s8 = inlined_call_operand.vmem [shape: f32[1,64], index: 8, kind: input, shape index: {}]
  %s9 = inlined_call_operand.vmem [shape: f32[64,128], index: 9, kind: input, shape index: {}]
  %s10 = inlined_call_operand.vmem [shape: f32[1,128], index: 10, kind: input, shape index: {}]
  %s11 = inlined_call_operand.hbm [shape: f32[2,128], index: 11, kind: output, shape index: {}]
  %s12 = sld [smem:[#allocation0]]
  $region54: #{tpu_custom_call.1} parent=0
    _
  %s14 = ssub.s32 1, %s12
  %s15 = scalar_select 0, %s14, %s12
  $region1: #{tpu_custom_call.1} parent=0
    #allocation2 [shape = 'u8[1024]{0}', space=vmem, size = 0x400, scoped, tag = 'output window, operand 0, single buffered']
    #allocation3 [shape = 's32[1]{0}', space=sflag, size = 0x4, scoped, tag = 'scoped memory for tpu_custom_call.1']
    %16 = vsyncpa [#allocation3], 0
    // Predicated region
    $region2: #{tpu_custom_call.1} parent=1 // pred_check
      _
    $region3: #{tpu_custom_call.1} parent=1 // pred_check_branch
      %18 = sbr.rel (0) target = $region5
    $region4: #{tpu_custom_call.1} parent=1 // pred_region
      _
    $region5: #{tpu_custom_call.1} parent=1 // pred_fallthru
      _
    // Predicated region
    $region6: #{tpu_custom_call.1} parent=1 // pred_check
      _
    $region7: #{tpu_custom_call.1} parent=1 // pred_check_branch
      %20 = sbr.rel (0) target = $region9
    $region8: #{tpu_custom_call.1} parent=1 // pred_region
      _
    $region9: #{tpu_custom_call.1} parent=1 // pred_fallthru
      _
    // Predicated region
    $region10: #{tpu_custom_call.1} parent=1 // pred_check
      _
    $region11: #{tpu_custom_call.1} parent=1 // pred_check_branch
      %22 = sbr.rel (0) target = $region13
    $region12: #{tpu_custom_call.1} parent=1 // pred_region
      _
    $region13: #{tpu_custom_call.1} parent=1 // pred_fallthru
      _
    // Predicated region
    $region14: #{tpu_custom_call.1} parent=1 // pred_check
      _
    $region15: #{tpu_custom_call.1} parent=1 // pred_check_branch
      %24 = sbr.rel (0) target = $region17
    $region16: #{tpu_custom_call.1} parent=1 // pred_region
      _
    $region17: #{tpu_custom_call.1} parent=1 // pred_fallthru
      _
    // Predicated region
    $region18: #{tpu_custom_call.1} parent=1 // pred_check
      _
    $region19: #{tpu_custom_call.1} parent=1 // pred_check_branch
      %26 = sbr.rel (0) target = $region21
    $region20: #{tpu_custom_call.1} parent=1 // pred_region
      _
    $region21: #{tpu_custom_call.1} parent=1 // pred_fallthru
      _
    // Predicated region
    $region22: #{tpu_custom_call.1} parent=1 // pred_check
      _
    $region23: #{tpu_custom_call.1} parent=1 // pred_check_branch
      %28 = sbr.rel (0) target = $region25
    $region24: #{tpu_custom_call.1} parent=1 // pred_region
      _
    $region25: #{tpu_custom_call.1} parent=1 // pred_fallthru
      _
    // Predicated region
    $region26: #{tpu_custom_call.1} parent=1 // pred_check
      _
    $region27: #{tpu_custom_call.1} parent=1 // pred_check_branch
      %30 = sbr.rel (0) target = $region29
    $region28: #{tpu_custom_call.1} parent=1 // pred_region
      _
    $region29: #{tpu_custom_call.1} parent=1 // pred_fallthru
      _
    // Predicated region
    $region30: #{tpu_custom_call.1} parent=1 // pred_check
      _
    $region31: #{tpu_custom_call.1} parent=1 // pred_check_branch
      %32 = sbr.rel (0) target = $region33
    $region32: #{tpu_custom_call.1} parent=1 // pred_region
      _
    $region33: #{tpu_custom_call.1} parent=1 // pred_fallthru
      _
    // Predicated region
    $region34: #{tpu_custom_call.1} parent=1 // pred_check
      _
    $region35: #{tpu_custom_call.1} parent=1 // pred_check_branch
      %34 = sbr.rel (0) target = $region37
    $region36: #{tpu_custom_call.1} parent=1 // pred_region
      _
    $region37: #{tpu_custom_call.1} parent=1 // pred_fallthru
      _
    // Predicated region
    $region38: #{tpu_custom_call.1} parent=1 // pred_check
      _
    $region39: #{tpu_custom_call.1} parent=1 // pred_check_branch
      %36 = sbr.rel (0) target = $region41
    $region40: #{tpu_custom_call.1} parent=1 // pred_region
      _
    $region41: #{tpu_custom_call.1} parent=1 // pred_fallthru
      _
    // Predicated region
    $region42: #{tpu_custom_call.1} parent=1 // pred_check
      _
    $region43: #{tpu_custom_call.1} parent=1 // pred_check_branch
      %38 = sbr.rel (0) target = $region45
    $region44: #{tpu_custom_call.1} parent=1 // pred_region
      _
    $region45: #{tpu_custom_call.1} parent=1 // pred_fallthru
      _
    %v39 = vld [vmem:[%s0] sm:$0xff]
    %v40 = vld [vmem:[%s2] sm:$0xf]
    %v41 = vld [vmem:[%s2 + $0x4] sm:$0xf]
    %v42 = vld [vmem:[%s2 + $0x8] sm:$0xf]
    %v43 = vld [vmem:[%s2 + $0xc] sm:$0xf]
    %v44 = vld [vmem:[%s2 + $0x10] sm:$0xf]
    %v45 = vld [vmem:[%s2 + $0x14] sm:$0xf]
    %v46 = vld [vmem:[%s2 + $0x18] sm:$0xf]
    %v47 = vld [vmem:[%s2 + $0x1c] sm:$0xf]
    %v48 = vld [vmem:[%s2 + $0x20] sm:$0xf]
    %v49 = vld [vmem:[%s2 + $0x24] sm:$0xf]
    %v50 = vld [vmem:[%s2 + $0x28] sm:$0xf]
    %v51 = vld [vmem:[%s2 + $0x2c] sm:$0xf]
    %v52 = vld [vmem:[%s2 + $0x30] sm:$0xf]
    %v53 = vld [vmem:[%s2 + $0x34] sm:$0xf]
    %v54 = vld [vmem:[%s2 + $0x38] sm:$0xf]
    %v55 = vld [vmem:[%s2 + $0x3c] sm:$0xf]
    %v56 = vld [vmem:[%s2 + $0x40] sm:$0xf]
    %v57 = vld [vmem:[%s2 + $0x44] sm:$0xf]
    %v58 = vld [vmem:[%s2 + $0x48] sm:$0xf]
    %v59 = vld [vmem:[%s2 + $0x4c] sm:$0xf]
    %v60 = vld [vmem:[%s2 + $0x50] sm:$0xf]
    %v61 = vld [vmem:[%s2 + $0x54] sm:$0xf]
    %v62 = vld [vmem:[%s2 + $0x58] sm:$0xf]
    %v63 = vld [vmem:[%s2 + $0x5c] sm:$0xf]
    %v64 = vld [vmem:[%s2 + $0x60] sm:$0xf]
    %v65 = vld [vmem:[%s2 + $0x64] sm:$0xf]
    %v66 = vld [vmem:[%s2 + $0x68] sm:$0xf]
    %v67 = vld [vmem:[%s2 + $0x6c] sm:$0xf]
    %v68 = vld [vmem:[%s2 + $0x70] sm:$0xf]
    %v69 = vld [vmem:[%s2 + $0x74] sm:$0xf]
    %v70 = vld [vmem:[%s2 + $0x78] sm:$0xf]
    %v71 = vld [vmem:[%s2 + $0x7c] sm:$0xf]
    %v72 = vld [vmem:[%s2 + $0x80] sm:$0xf]
    %v73 = vld [vmem:[%s2 + $0x84] sm:$0xf]
    %v74 = vld [vmem:[%s2 + $0x88] sm:$0xf]
    %v75 = vld [vmem:[%s2 + $0x8c] sm:$0xf]
    %v76 = vld [vmem:[%s2 + $0x90] sm:$0xf]
    %v77 = vld [vmem:[%s2 + $0x94] sm:$0xf]
    %v78 = vld [vmem:[%s2 + $0x98] sm:$0xf]
    %v79 = vld [vmem:[%s2 + $0x9c] sm:$0xf]
    %v80 = vld [vmem:[%s2 + $0xa0] sm:$0xf]
    %v81 = vld [vmem:[%s2 + $0xa4] sm:$0xf]
    %v82 = vld [vmem:[%s2 + $0xa8] sm:$0xf]
    %v83 = vld [vmem:[%s2 + $0xac] sm:$0xf]
    %v84 = vld [vmem:[%s2 + $0xb0] sm:$0xf]
    %v85 = vld [vmem:[%s2 + $0xb4] sm:$0xf]
    %v86 = vld [vmem:[%s2 + $0xb8] sm:$0xf]
    %v87 = vld [vmem:[%s2 + $0xbc] sm:$0xf]
    %v88 = vld [vmem:[%s2 + $0xc0] sm:$0xf]
    %v89 = vld [vmem:[%s2 + $0xc4] sm:$0xf]
    %v90 = vld [vmem:[%s2 + $0xc8] sm:$0xf]
    %v91 = vld [vmem:[%s2 + $0xcc] sm:$0xf]
    %v92 = vld [vmem:[%s2 + $0xd0] sm:$0xf]
    %v93 = vld [vmem:[%s2 + $0xd4] sm:$0xf]
    %v94 = vld [vmem:[%s2 + $0xd8] sm:$0xf]
    %v95 = vld [vmem:[%s2 + $0xdc] sm:$0xf]
    %v96 = vld [vmem:[%s2 + $0xe0] sm:$0xf]
    %v97 = vld [vmem:[%s2 + $0xe4] sm:$0xf]
    %v98 = vld [vmem:[%s2 + $0xe8] sm:$0xf]
    %v99 = vld [vmem:[%s2 + $0xec] sm:$0xf]
    %v100 = vld [vmem:[%s2 + $0xf0] sm:$0xf]
    %v101 = vld [vmem:[%s2 + $0xf4] sm:$0xf]
    %v102 = vld [vmem:[%s2 + $0xf8] sm:$0xf]
    %v103 = vld [vmem:[%s2 + $0xfc] sm:$0xf]
    %v104 = vld [vmem:[%s2 + $0x100] sm:$0xf]
    %v105 = vld [vmem:[%s2 + $0x104] sm:$0xf]
    %v106 = vld [vmem:[%s2 + $0x108] sm:$0xf]
    %v107 = vld [vmem:[%s2 + $0x10c] sm:$0xf]
    %v108 = vld [vmem:[%s2 + $0x110] sm:$0xf]
    %v109 = vld [vmem:[%s2 + $0x114] sm:$0xf]
    %v110 = vld [vmem:[%s2 + $0x118] sm:$0xf]
    %v111 = vld [vmem:[%s2 + $0x11c] sm:$0xf]
    %v112 = vld [vmem:[%s2 + $0x120] sm:$0xf]
    %v113 = vld [vmem:[%s2 + $0x124] sm:$0xf]
    %v114 = vld [vmem:[%s2 + $0x128] sm:$0xf]
    %v115 = vld [vmem:[%s2 + $0x12c] sm:$0xf]
    %v116 = vld [vmem:[%s2 + $0x130] sm:$0xf]
    %v117 = vld [vmem:[%s2 + $0x134] sm:$0xf]
    %v118 = vld [vmem:[%s2 + $0x138] sm:$0xf]
    %v119 = vld [vmem:[%s2 + $0x13c] sm:$0xf]
    %v120 = vld [vmem:[%s2 + $0x140] sm:$0xf]
    %v121 = vld [vmem:[%s2 + $0x144] sm:$0xf]
    %v122 = vld [vmem:[%s2 + $0x148] sm:$0xf]
    %v123 = vld [vmem:[%s2 + $0x14c] sm:$0xf]
    %v124 = vld [vmem:[%s2 + $0x150] sm:$0xf]
    %v125 = vld [vmem:[%s2 + $0x154] sm:$0xf]
    %v126 = vld [vmem:[%s2 + $0x158] sm:$0xf]
    %v127 = vld [vmem:[%s2 + $0x15c] sm:$0xf]
    %v128 = vld [vmem:[%s2 + $0x160] sm:$0xf]
    %v129 = vld [vmem:[%s2 + $0x164] sm:$0xf]
    %v130 = vld [vmem:[%s2 + $0x168] sm:$0xf]
    %v131 = vld [vmem:[%s2 + $0x16c] sm:$0xf]
    %v132 = vld [vmem:[%s2 + $0x170] sm:$0xf]
    %v133 = vld [vmem:[%s2 + $0x174] sm:$0xf]
    %v134 = vld [vmem:[%s2 + $0x178] sm:$0xf]
    %v135 = vld [vmem:[%s2 + $0x17c] sm:$0xf]
    %v136 = vld [vmem:[%s2 + $0x180] sm:$0xf]
    %v137 = vld [vmem:[%s2 + $0x184] sm:$0xf]
    %v138 = vld [vmem:[%s2 + $0x188] sm:$0xf]
    %v139 = vld [vmem:[%s2 + $0x18c] sm:$0xf]
    %v140 = vld [vmem:[%s2 + $0x190] sm:$0xf]
    %v141 = vld [vmem:[%s2 + $0x194] sm:$0xf]
    %v142 = vld [vmem:[%s2 + $0x198] sm:$0xf]
    %v143 = vld [vmem:[%s2 + $0x19c] sm:$0xf]
    %v144 = vld [vmem:[%s2 + $0x1a0] sm:$0xf]
    %v145 = vld [vmem:[%s2 + $0x1a4] sm:$0xf]
    %v146 = vld [vmem:[%s2 + $0x1a8] sm:$0xf]
    %v147 = vld [vmem:[%s2 + $0x1ac] sm:$0xf]
    %v148 = vld [vmem:[%s2 + $0x1b0] sm:$0xf]
    %v149 = vld [vmem:[%s2 + $0x1b4] sm:$0xf]
    %v150 = vld [vmem:[%s2 + $0x1b8] sm:$0xf]
    %v151 = vld [vmem:[%s2 + $0x1bc] sm:$0xf]
    %v152 = vld [vmem:[%s2 + $0x1c0] sm:$0xf]
    %v153 = vld [vmem:[%s2 + $0x1c4] sm:$0xf]
    %v154 = vld [vmem:[%s2 + $0x1c8] sm:$0xf]
    %v155 = vld [vmem:[%s2 + $0x1cc] sm:$0xf]
    %v156 = vld [vmem:[%s2 + $0x1d0] sm:$0xf]
    %v157 = vld [vmem:[%s2 + $0x1d4] sm:$0xf]
    %v158 = vld [vmem:[%s2 + $0x1d8] sm:$0xf]
    %v159 = vld [vmem:[%s2 + $0x1dc] sm:$0xf]
    %v160 = vld [vmem:[%s2 + $0x1e0] sm:$0xf]
    %v161 = vld [vmem:[%s2 + $0x1e4] sm:$0xf]
    %v162 = vld [vmem:[%s2 + $0x1e8] sm:$0xf]
    %v163 = vld [vmem:[%s2 + $0x1ec] sm:$0xf]
    %v164 = vld [vmem:[%s2 + $0x1f0] sm:$0xf]
    %v165 = vld [vmem:[%s2 + $0x1f4] sm:$0xf]
    %v166 = vld [vmem:[%s2 + $0x1f8] sm:$0xf]
    %v167 = vld [vmem:[%s2 + $0x1fc] sm:$0xf]
    %v168 = vld [vmem:[%s3] sm:$0x1]
    %v170 = vperm.slane %v168, 0
    %173 = vst [vmem:[#allocation1] ss:$9 sm:$0xff] %v39
    %v174 = vld [vmem:[#allocation1] sm:$0xff]
    %v175 = vld [vmem:[#allocation1 + $0x9] sm:$0xff]
    %v176 = vld [vmem:[#allocation1 + $0x12] sm:$0xff]
    %v177 = vld [vmem:[#allocation1 + $0x1b] sm:$0xff]
    %v178 = vld [vmem:[#allocation1 + $0x24] sm:$0xff]
    %v179 = vld [vmem:[#allocation1 + $0x2d] sm:$0xff]
    %v180 = vld [vmem:[#allocation1 + $0x36] sm:$0xff]
    %v181 = vld [vmem:[#allocation1 + $0x3f] sm:$0xff]
    %v318 = vunpack.c.l.b16 %v40
    %v319 = vunpack.c.l.b16 %v41
    %v320 = vunpack.c.l.b16 %v42
    %v321 = vunpack.c.l.b16 %v43
    %v322 = vunpack.c.l.b16 %v44
    %v323 = vunpack.c.l.b16 %v45
    %v324 = vunpack.c.l.b16 %v46
    %v325 = vunpack.c.l.b16 %v47
    %v326 = vunpack.c.l.b16 %v48
    %v327 = vunpack.c.l.b16 %v49
    %v328 = vunpack.c.l.b16 %v50
    %v329 = vunpack.c.l.b16 %v51
    %v330 = vunpack.c.l.b16 %v52
    %v331 = vunpack.c.l.b16 %v53
    %v332 = vunpack.c.l.b16 %v54
    %v333 = vunpack.c.l.b16 %v55
    %v334 = vunpack.c.l.b16 %v56
    %v335 = vunpack.c.l.b16 %v57
    %v336 = vunpack.c.l.b16 %v58
    %v337 = vunpack.c.l.b16 %v59
    %v338 = vunpack.c.l.b16 %v60
    %v339 = vunpack.c.l.b16 %v61
    %v340 = vunpack.c.l.b16 %v62
    %v341 = vunpack.c.l.b16 %v63
    %v342 = vunpack.c.l.b16 %v64
    %v343 = vunpack.c.l.b16 %v65
    %v344 = vunpack.c.l.b16 %v66
    %v345 = vunpack.c.l.b16 %v67
    %v346 = vunpack.c.l.b16 %v68
    %v347 = vunpack.c.l.b16 %v69
    %v348 = vunpack.c.l.b16 %v70
    %v349 = vunpack.c.l.b16 %v71
    %v350 = vunpack.c.l.b16 %v72
    %v351 = vunpack.c.l.b16 %v73
    %v352 = vunpack.c.l.b16 %v74
    %v353 = vunpack.c.l.b16 %v75
    %v354 = vunpack.c.l.b16 %v76
    %v355 = vunpack.c.l.b16 %v77
    %v356 = vunpack.c.l.b16 %v78
    %v357 = vunpack.c.l.b16 %v79
    %v358 = vunpack.c.l.b16 %v80
    %v359 = vunpack.c.l.b16 %v81
    %v360 = vunpack.c.l.b16 %v82
    %v361 = vunpack.c.l.b16 %v83
    %v362 = vunpack.c.l.b16 %v84
    %v363 = vunpack.c.l.b16 %v85
    %v364 = vunpack.c.l.b16 %v86
    %v365 = vunpack.c.l.b16 %v87
    %v366 = vunpack.c.l.b16 %v88
    %v367 = vunpack.c.l.b16 %v89
    %v368 = vunpack.c.l.b16 %v90
    %v369 = vunpack.c.l.b16 %v91
    %v370 = vunpack.c.l.b16 %v92
    %v371 = vunpack.c.l.b16 %v93
    %v372 = vunpack.c.l.b16 %v94
    %v373 = vunpack.c.l.b16 %v95
    %v374 = vunpack.c.l.b16 %v96
    %v375 = vunpack.c.l.b16 %v97
    %v376 = vunpack.c.l.b16 %v98
    %v377 = vunpack.c.l.b16 %v99
    %v378 = vunpack.c.l.b16 %v100
    %v379 = vunpack.c.l.b16 %v101
    %v380 = vunpack.c.l.b16 %v102
    %v381 = vunpack.c.l.b16 %v103
    %v382 = vunpack.c.l.b16 %v104
    %v383 = vunpack.c.l.b16 %v105
    %v384 = vunpack.c.l.b16 %v106
    %v385 = vunpack.c.l.b16 %v107
    %v386 = vunpack.c.l.b16 %v108
    %v387 = vunpack.c.l.b16 %v109
    %v388 = vunpack.c.l.b16 %v110
    %v389 = vunpack.c.l.b16 %v111
    %v390 = vunpack.c.l.b16 %v112
    %v391 = vunpack.c.l.b16 %v113
    %v392 = vunpack.c.l.b16 %v114
    %v393 = vunpack.c.l.b16 %v115
    %v394 = vunpack.c.l.b16 %v116
    %v395 = vunpack.c.l.b16 %v117
    %v396 = vunpack.c.l.b16 %v118
    %v397 = vunpack.c.l.b16 %v119
    %v398 = vunpack.c.l.b16 %v120
    %v399 = vunpack.c.l.b16 %v121
    %v400 = vunpack.c.l.b16 %v122
    %v401 = vunpack.c.l.b16 %v123
    %v402 = vunpack.c.l.b16 %v124
    %v403 = vunpack.c.l.b16 %v125
    %v404 = vunpack.c.l.b16 %v126
    %v405 = vunpack.c.l.b16 %v127
    %v406 = vunpack.c.l.b16 %v128
    %v407 = vunpack.c.l.b16 %v129
    %v408 = vunpack.c.l.b16 %v130
    %v409 = vunpack.c.l.b16 %v131
    %v410 = vunpack.c.l.b16 %v132
    %v411 = vunpack.c.l.b16 %v133
    %v412 = vunpack.c.l.b16 %v134
    %v413 = vunpack.c.l.b16 %v135
    %v414 = vunpack.c.l.b16 %v136
    %v415 = vunpack.c.l.b16 %v137
    %v416 = vunpack.c.l.b16 %v138
    %v417 = vunpack.c.l.b16 %v139
    %v418 = vunpack.c.l.b16 %v140
    %v419 = vunpack.c.l.b16 %v141
    %v420 = vunpack.c.l.b16 %v142
    %v421 = vunpack.c.l.b16 %v143
    %v422 = vunpack.c.l.b16 %v144
    %v423 = vunpack.c.l.b16 %v145
    %v424 = vunpack.c.l.b16 %v146
    %v425 = vunpack.c.l.b16 %v147
    %v426 = vunpack.c.l.b16 %v148
    %v427 = vunpack.c.l.b16 %v149
    %v428 = vunpack.c.l.b16 %v150
    %v429 = vunpack.c.l.b16 %v151
    %v430 = vunpack.c.l.b16 %v152
    %v431 = vunpack.c.l.b16 %v153
    %v432 = vunpack.c.l.b16 %v154
    %v433 = vunpack.c.l.b16 %v155
    %v434 = vunpack.c.l.b16 %v156
    %v435 = vunpack.c.l.b16 %v157
    %v436 = vunpack.c.l.b16 %v158
    %v437 = vunpack.c.l.b16 %v159
    %v438 = vunpack.c.l.b16 %v160
    %v439 = vunpack.c.l.b16 %v161
    %v440 = vunpack.c.l.b16 %v162
    %v441 = vunpack.c.l.b16 %v163
    %v442 = vunpack.c.l.b16 %v164
    %v443 = vunpack.c.l.b16 %v165
    %v444 = vunpack.c.l.b16 %v166
    %v445 = vunpack.c.l.b16 %v167
    %v446 = vpack.c.b16 %v319, %v318
    %v447 = vpack.c.b16 %v321, %v320
    %v448 = vpack.c.b16 %v323, %v322
    %v449 = vpack.c.b16 %v325, %v324
    %v450 = vpack.c.b16 %v327, %v326
    %v451 = vpack.c.b16 %v329, %v328
    %v452 = vpack.c.b16 %v331, %v330
    %v453 = vpack.c.b16 %v333, %v332
    %v454 = vpack.c.b16 %v335, %v334
    %v455 = vpack.c.b16 %v337, %v336
    %v456 = vpack.c.b16 %v339, %v338
    %v457 = vpack.c.b16 %v341, %v340
    %v458 = vpack.c.b16 %v343, %v342
    %v459 = vpack.c.b16 %v345, %v344
    %v460 = vpack.c.b16 %v347, %v346
    %v461 = vpack.c.b16 %v349, %v348
    %v462 = vpack.c.b16 %v351, %v350
    %v463 = vpack.c.b16 %v353, %v352
    %v464 = vpack.c.b16 %v355, %v354
    %v465 = vpack.c.b16 %v357, %v356
    %v466 = vpack.c.b16 %v359, %v358
    %v467 = vpack.c.b16 %v361, %v360
    %v468 = vpack.c.b16 %v363, %v362
    %v469 = vpack.c.b16 %v365, %v364
    %v470 = vpack.c.b16 %v367, %v366
    %v471 = vpack.c.b16 %v369, %v368
    %v472 = vpack.c.b16 %v371, %v370
    %v473 = vpack.c.b16 %v373, %v372
    %v474 = vpack.c.b16 %v375, %v374
    %v475 = vpack.c.b16 %v377, %v376
    %v476 = vpack.c.b16 %v379, %v378
    %v477 = vpack.c.b16 %v381, %v380
    %v478 = vpack.c.b16 %v383, %v382
    %v479 = vpack.c.b16 %v385, %v384
    %v480 = vpack.c.b16 %v387, %v386
    %v481 = vpack.c.b16 %v389, %v388
    %v482 = vpack.c.b16 %v391, %v390
    %v483 = vpack.c.b16 %v393, %v392
    %v484 = vpack.c.b16 %v395, %v394
    %v485 = vpack.c.b16 %v397, %v396
    %v486 = vpack.c.b16 %v399, %v398
    %v487 = vpack.c.b16 %v401, %v400
    %v488 = vpack.c.b16 %v403, %v402
    %v489 = vpack.c.b16 %v405, %v404
    %v490 = vpack.c.b16 %v407, %v406
    %v491 = vpack.c.b16 %v409, %v408
    %v492 = vpack.c.b16 %v411, %v410
    %v493 = vpack.c.b16 %v413, %v412
    %v494 = vpack.c.b16 %v415, %v414
    %v495 = vpack.c.b16 %v417, %v416
    %v496 = vpack.c.b16 %v419, %v418
    %v497 = vpack.c.b16 %v421, %v420
    %v498 = vpack.c.b16 %v423, %v422
    %v499 = vpack.c.b16 %v425, %v424
    %v500 = vpack.c.b16 %v427, %v426
    %v501 = vpack.c.b16 %v429, %v428
    %v502 = vpack.c.b16 %v431, %v430
    %v503 = vpack.c.b16 %v433, %v432
    %v504 = vpack.c.b16 %v435, %v434
    %v505 = vpack.c.b16 %v437, %v436
    %v506 = vpack.c.b16 %v439, %v438
    %v507 = vpack.c.b16 %v441, %v440
    %v508 = vpack.c.b16 %v443, %v442
    %v509 = vpack.c.b16 %v445, %v444
    %574 = vmatpush.bf16.msra.mxu0 %v453
    %575 = vmatpush.bf16.msra.mxu0 %v452
    %576 = vmatpush.bf16.msra.mxu0 %v451
    %577 = vmatpush.bf16.msra.mxu0 %v450
    %578 = vmatpush.bf16.msra.mxu0 %v449
    %579 = vmatpush.bf16.msra.mxu0 %v448
    %580 = vmatpush.bf16.msra.mxu0 %v447
    %581 = vmatpush.bf16.msra.mxu0 %v446
    %582 = vmatmul.bf16.gmra.mxu0 %v174
    %v583 = vpop.f32.mrf.mxu0
    %v584 = vadd.f32 %v170, %v583
    %v585 = vpop.f32.mrf.mxu0
    %586 = vdwg.mxu0
    %587 = vmatpush.bf16.msra.mxu0 %v461
    %588 = vmatpush.bf16.msra.mxu0 %v460
    %589 = vmatpush.bf16.msra.mxu0 %v459
    %590 = vmatpush.bf16.msra.mxu0 %v458
    %591 = vmatpush.bf16.msra.mxu0 %v457
    %592 = vmatpush.bf16.msra.mxu0 %v456
    %593 = vmatpush.bf16.msra.mxu0 %v455
    %594 = vmatpush.bf16.msra.mxu0 %v454
    %595 = vmatmul.bf16.gmra.mxu0 %v175
    %v596 = vpop.f32.mrf.mxu0
    %v597 = vadd.f32 %v584, %v596
    %v598 = vpop.f32.mrf.mxu0
    %599 = vdwg.mxu0
    %600 = vmatpush.bf16.msra.mxu0 %v469
    %601 = vmatpush.bf16.msra.mxu0 %v468
    %602 = vmatpush.bf16.msra.mxu0 %v467
    %603 = vmatpush.bf16.msra.mxu0 %v466
    %604 = vmatpush.bf16.msra.mxu0 %v465
    %605 = vmatpush.bf16.msra.mxu0 %v464
    %606 = vmatpush.bf16.msra.mxu0 %v463
    %607 = vmatpush.bf16.msra.mxu0 %v462
    %608 = vmatmul.bf16.gmra.mxu0 %v176
    %v609 = vpop.f32.mrf.mxu0
    %v610 = vadd.f32 %v597, %v609
    %v611 = vpop.f32.mrf.mxu0
    %612 = vdwg.mxu0
    %613 = vmatpush.bf16.msra.mxu0 %v477
    %614 = vmatpush.bf16.msra.mxu0 %v476
    %615 = vmatpush.bf16.msra.mxu0 %v475
    %616 = vmatpush.bf16.msra.mxu0 %v474
    %617 = vmatpush.bf16.msra.mxu0 %v473
    %618 = vmatpush.bf16.msra.mxu0 %v472
    %619 = vmatpush.bf16.msra.mxu0 %v471
    %620 = vmatpush.bf16.msra.mxu0 %v470
    %621 = vmatmul.bf16.gmra.mxu0 %v177
    %v622 = vpop.f32.mrf.mxu0
    %v623 = vadd.f32 %v610, %v622
    %v624 = vpop.f32.mrf.mxu0
    %625 = vdwg.mxu0
    %626 = vmatpush.bf16.msra.mxu0 %v485
    %627 = vmatpush.bf16.msra.mxu0 %v484
    %628 = vmatpush.bf16.msra.mxu0 %v483
    %629 = vmatpush.bf16.msra.mxu0 %v482
    %630 = vmatpush.bf16.msra.mxu0 %v481
    %631 = vmatpush.bf16.msra.mxu0 %v480
    %632 = vmatpush.bf16.msra.mxu0 %v479
    %633 = vmatpush.bf16.msra.mxu0 %v478
    %634 = vmatmul.bf16.gmra.mxu0 %v178
    %v635 = vpop.f32.mrf.mxu0
    %v636 = vadd.f32 %v623, %v635
    %v637 = vpop.f32.mrf.mxu0
    %638 = vdwg.mxu0
    %639 = vmatpush.bf16.msra.mxu0 %v493
    %640 = vmatpush.bf16.msra.mxu0 %v492
    %641 = vmatpush.bf16.msra.mxu0 %v491
    %642 = vmatpush.bf16.msra.mxu0 %v490
    %643 = vmatpush.bf16.msra.mxu0 %v489
    %644 = vmatpush.bf16.msra.mxu0 %v488
    %645 = vmatpush.bf16.msra.mxu0 %v487
    %646 = vmatpush.bf16.msra.mxu0 %v486
    %647 = vmatmul.bf16.gmra.mxu0 %v179
    %v648 = vpop.f32.mrf.mxu0
    %v649 = vadd.f32 %v636, %v648
    %v650 = vpop.f32.mrf.mxu0
    %651 = vdwg.mxu0
    %652 = vmatpush.bf16.msra.mxu0 %v501
    %653 = vmatpush.bf16.msra.mxu0 %v500
    %654 = vmatpush.bf16.msra.mxu0 %v499
    %655 = vmatpush.bf16.msra.mxu0 %v498
    %656 = vmatpush.bf16.msra.mxu0 %v497
    %657 = vmatpush.bf16.msra.mxu0 %v496
    %658 = vmatpush.bf16.msra.mxu0 %v495
    %659 = vmatpush.bf16.msra.mxu0 %v494
    %660 = vmatmul.bf16.gmra.mxu0 %v180
    %v661 = vpop.f32.mrf.mxu0
    %v662 = vadd.f32 %v649, %v661
    %v663 = vpop.f32.mrf.mxu0
    %664 = vdwg.mxu0
    %665 = vmatpush.bf16.msra.mxu0 %v509
    %666 = vmatpush.bf16.msra.mxu0 %v508
    %667 = vmatpush.bf16.msra.mxu0 %v507
    %668 = vmatpush.bf16.msra.mxu0 %v506
    %669 = vmatpush.bf16.msra.mxu0 %v505
    %670 = vmatpush.bf16.msra.mxu0 %v504
    %671 = vmatpush.bf16.msra.mxu0 %v503
    %672 = vmatpush.bf16.msra.mxu0 %v502
    %673 = vmatmul.bf16.gmra.mxu0 %v181
    %v674 = vpop.f32.mrf.mxu0
    %v675 = vadd.f32 %v662, %v674
    %v676 = vpop.f32.mrf.mxu0
    %677 = vdwg.mxu0
    %v678 = vmax.f32 %v675, 0.0
    %v679 = vld [vmem:[%s4] sm:$0xff]
    %v680 = vld [vmem:[%s4 + $0x8] sm:$0xff]
    %v681 = vld [vmem:[%s4 + $0x10] sm:$0xff]
    %v682 = vld [vmem:[%s4 + $0x18] sm:$0xff]
    %v683 = vld [vmem:[%s1] sm:$0x3]
    %v684 = vld [vmem:[%s5] sm:$0xf]
    %vm685 = vcmask 31744
    %v687 = vsel %vm685, %v683, 0
    %vm689 = vcmask 1043456
    %v691 = vsel %vm689, %v684, 0
    %693 = vmatpush.msra.mxu0 0.0
    %694 = vmatpush.msra.mxu0 0.0
    %695 = vmatpush.msra.mxu0 0.0
    %696 = vmatpush.msra.mxu0 0.0
    %697 = vmatpush.msra.mxu0 0.0
    %698 = vmatpush.msra.mxu0 0.0
    %699 = vmatpush.msra.mxu0 0.0
    %700 = vmatpush.msra.mxu0 0.0
    %701 = vmatpush.msra.mxu0 0.0
    %702 = vmatpush.msra.mxu0 0.0
    %703 = vmatpush.msra.mxu0 0.0
    %704 = vmatpush.msra.mxu0 0.0
    %705 = vmatpush.msra.mxu0 0.0
    %706 = vmatpush.msra.mxu0 0.0
    %707 = vmatpush.msra.mxu0 0.0
    %708 = vmatpush.msra.mxu0 %v691
    %709 = vmatmul.f32.gmra.mxu0 %v687
    %v710 = vpop.f32.mrf.mxu0
    %v711 = vadd.f32 0.0, %v710
    %712 = vdwg.mxu0
    %vm713 = vcmask 261120
    %v715 = vsel %vm713, %v678, 0
    %717 = vmatpush.msra.mxu0 0.0
    %718 = vmatpush.msra.mxu0 0.0
    %719 = vmatpush.msra.mxu0 0.0
    %720 = vmatpush.msra.mxu0 0.0
    %721 = vmatpush.msra.mxu0 0.0
    %722 = vmatpush.msra.mxu0 0.0
    %723 = vmatpush.msra.mxu0 0.0
    %724 = vmatpush.msra.mxu0 0.0
    %725 = vmatpush.msra.mxu0 0.0
    %726 = vmatpush.msra.mxu0 0.0
    %727 = vmatpush.msra.mxu0 0.0
    %728 = vmatpush.msra.mxu0 0.0
    %729 = vmatpush.msra.mxu0 %v682
    %730 = vmatpush.msra.mxu0 %v681
    %731 = vmatpush.msra.mxu0 %v680
    %732 = vmatpush.msra.mxu0 %v679
    %733 = vmatmul.f32.gmra.mxu0 %v715
    %v734 = vpop.f32.mrf.mxu0
    %v735 = vadd.f32 %v711, %v734
    %736 = vdwg.mxu0
    %v737 = vld [vmem:[%s6] sm:$0x1]
    %v739 = vperm.slane %v737, 0
    %v741 = vadd.f32 %v735, %v739
    %v742 = vmax.f32 %v741, 0.0
    %v743 = vld [vmem:[%s7] sm:$0xff]
    %v744 = vld [vmem:[%s7 + $0x8] sm:$0xff]
    %v745 = vld [vmem:[%s7 + $0x10] sm:$0xff]
    %v746 = vld [vmem:[%s7 + $0x18] sm:$0xff]
    %v747 = vld [vmem:[%s7 + $0x20] sm:$0xff]
    %v748 = vld [vmem:[%s7 + $0x28] sm:$0xff]
    %v749 = vld [vmem:[%s7 + $0x30] sm:$0xff]
    %v750 = vld [vmem:[%s7 + $0x38] sm:$0xff]
    %v751 = vld [vmem:[%s8] sm:$0x1]
    %v753 = vperm.slane %v751, 0
    %vm755 = vcmask 523264
    %v757 = vsel %vm755, %v742, 0
    %759 = vmatpush.msra.mxu0 0.0
    %760 = vmatpush.msra.mxu0 0.0
    %761 = vmatpush.msra.mxu0 0.0
    %762 = vmatpush.msra.mxu0 0.0
    %763 = vmatpush.msra.mxu0 0.0
    %764 = vmatpush.msra.mxu0 0.0
    %765 = vmatpush.msra.mxu0 0.0
    %766 = vmatpush.msra.mxu0 0.0
    %767 = vmatpush.msra.mxu0 %v750
    %768 = vmatpush.msra.mxu0 %v749
    %769 = vmatpush.msra.mxu0 %v748
    %770 = vmatpush.msra.mxu0 %v747
    %771 = vmatpush.msra.mxu0 %v746
    %772 = vmatpush.msra.mxu0 %v745
    %773 = vmatpush.msra.mxu0 %v744
    %774 = vmatpush.msra.mxu0 %v743
    %775 = vmatmul.f32.gmra.mxu0 %v757
    %v776 = vpop.f32.mrf.mxu0
    %v777 = vadd.f32 %v753, %v776
    %778 = vdwg.mxu0
    %v779 = vmax.f32 %v777, 0.0
    %v780 = vld [vmem:[%s9] sm:$0xff]
    %v781 = vld [vmem:[%s9 + $0x8] sm:$0xff]
    %v782 = vld [vmem:[%s9 + $0x10] sm:$0xff]
    %v783 = vld [vmem:[%s9 + $0x18] sm:$0xff]
    %v784 = vld [vmem:[%s9 + $0x20] sm:$0xff]
    %v785 = vld [vmem:[%s9 + $0x28] sm:$0xff]
    %v786 = vld [vmem:[%s9 + $0x30] sm:$0xff]
    %v787 = vld [vmem:[%s9 + $0x38] sm:$0xff]
    %v788 = vld [vmem:[%s10] sm:$0x1]
    %v790 = vperm.slane %v788, 0
    %v793 = vsel %vm755, %v779, 0
    %795 = vmatpush.msra.mxu0 0.0
    %796 = vmatpush.msra.mxu0 0.0
    %797 = vmatpush.msra.mxu0 0.0
    %798 = vmatpush.msra.mxu0 0.0
    %799 = vmatpush.msra.mxu0 0.0
    %800 = vmatpush.msra.mxu0 0.0
    %801 = vmatpush.msra.mxu0 0.0
    %802 = vmatpush.msra.mxu0 0.0
    %803 = vmatpush.msra.mxu0 %v787
    %804 = vmatpush.msra.mxu0 %v786
    %805 = vmatpush.msra.mxu0 %v785
    %806 = vmatpush.msra.mxu0 %v784
    %807 = vmatpush.msra.mxu0 %v783
    %808 = vmatpush.msra.mxu0 %v782
    %809 = vmatpush.msra.mxu0 %v781
    %810 = vmatpush.msra.mxu0 %v780
    %811 = vmatmul.f32.gmra.mxu0 %v793
    %v812 = vpop.f32.mrf.mxu0
    %v813 = vadd.f32 %v790, %v812
    %814 = vdwg.mxu0
    %815 = vst [vmem:[#allocation2] sm:$0x3] %v813
    // Predicated region
    $region46: #{tpu_custom_call.1} parent=1 // pred_check
      _
    $region47: #{tpu_custom_call.1} parent=1 // pred_check_branch
      %817 = sbr.rel (0) target = $region49
    $region48: #{tpu_custom_call.1} parent=1 // pred_region
      %819 = vsyncadd [#allocation3], 0
      %s821 = sshll.u32 [#allocation2], 4
      %s822 = int_to_ptr.vmem [resolvable:$true] %s821
      %s823 = sshll.u32 %s11, 4
      %s824 = int_to_ptr.hbm [resolvable:$true] %s823
      %826 = dma.vmem_to_hbm [thread:$0]  %s822, 32, %s824, [#allocation3]
    $region49: #{tpu_custom_call.1} parent=1 // pred_fallthru
      _
    // Predicated region
    $region50: #{tpu_custom_call.1} parent=1 // pred_check
      _
    $region51: #{tpu_custom_call.1} parent=1 // pred_check_branch
      %828 = sbr.rel (0) target = $region53
    $region52: #{tpu_custom_call.1} parent=1 // pred_region
      %830 = dma.done [#allocation3], 32
    $region53: #{tpu_custom_call.1} parent=1 // pred_fallthru
      _
    %831 = vsyncpa [#allocation3], 1

</llo_original>
